<compile_context>
chip_gen: v7x
topology: tpu7x:2x2x1
jax: 0.10.0
libtpu: 0.0.40
codegen_flags: <defaults>
</compile_context>

<pallas_src>
import math
import jax
import jax.numpy as jnp
from jax.experimental import pallas as pl
from jax.experimental.pallas import tpu as pltpu

INPUT_DIM = 8                      # LunarLanderContinuous-v2 observation dim
ACTION_DIM = 2                     # LunarLanderContinuous-v2 action dim
IN_TOTAL = INPUT_DIM + ACTION_DIM  # 10
SA_PAD = 16                        # layer-1 K padded to 16 (zero rows in w1)
HIDDEN = 256
DEFAULT_TB = 1024                  # batch-tile rows (multiple of 8)


def _round_up(x, m):
    return ((x + m - 1) // m) * m


def _critic_kernel(sa_ref, w1_ref, b1_ref,
                   w2a_ref, b2a_ref, w2b_ref, b2b_ref,
                   w3a_ref, w3b_ref, b3_ref,
                   q_ref):
    """One batch tile: both Q-heads, fused at layer 1 and layer 3, bf16 MXU."""
    # Layer 1 (both heads fused): single (TB,16) x (16,512) bf16 dot.
    h1 = jnp.tanh(
        jnp.dot(sa_ref[...], w1_ref[...], preferred_element_type=jnp.float32)
        + b1_ref[...])                                   # (TB, 512) f32

    h1a = h1[:, :HIDDEN].astype(jnp.bfloat16)            # head 1 (q1)
    h1b = h1[:, HIDDEN:].astype(jnp.bfloat16)            # head 2 (q2)

    # Layer 2: two 256x256 bf16 dots; bias add + tanh in f32.
    h2a = jnp.tanh(
        jnp.dot(h1a, w2a_ref[...], preferred_element_type=jnp.float32)
        + b2a_ref[...]).astype(jnp.bfloat16)
    h2b = jnp.tanh(
        jnp.dot(h1b, w2b_ref[...], preferred_element_type=jnp.float32)
        + b2b_ref[...]).astype(jnp.bfloat16)

    # Layer 3: split dots against the two (256, 2) halves of the fused w3
    # (no lane-axis concat / VMEM copy).  Single (TB, 2) store:
    # col 0 = q1, col 1 = q2.
    q_ref[...] = (
        jnp.dot(h2a, w3a_ref[...], preferred_element_type=jnp.float32)
        + jnp.dot(h2b, w3b_ref[...], preferred_element_type=jnp.float32)
        + b3_ref[...])


def prepare_critic_params(params):
    """One-time fusion / padding / bf16 cast of the raw per-head parameters.

    params = (w1a, b1a, w2a, b2a, w3a, b3a, w1b, b1b, w2b, b2b, w3b, b3b)
    with w* of shape (fan_in, fan_out) and b* of shape (1, fan_out).
    """
    (w1a, b1a, w2a, b2a, w3a, b3a,
     w1b, b1b, w2b, b2b, w3b, b3b) = [jnp.asarray(p, jnp.float32) for p in params]

    # Layer 1: both heads side by side, K zero-padded from 10 -> 16.
    w1 = jnp.concatenate([w1a, w1b], axis=1)                 # (10, 512)
    w1 = jnp.pad(w1, ((0, SA_PAD - IN_TOTAL), (0, 0)))       # (16, 512)
    b1 = jnp.concatenate([b1a, b1b], axis=1)                 # (1, 512)

    # Layer 3: block-structured halves; q1 -> column 0, q2 -> column 1.
    w3a_half = jnp.concatenate([w3a, jnp.zeros_like(w3a)], axis=1)   # (256, 2)
    w3b_half = jnp.concatenate([jnp.zeros_like(w3b), w3b], axis=1)   # (256, 2)
    b3 = jnp.concatenate([b3a, b3b], axis=1)                 # (1, 2)

    bf = jnp.bfloat16
    return dict(
        w1=w1.astype(bf), b1=b1,
        w2a=w2a.astype(bf), b2a=b2a,
        w2b=w2b.astype(bf), b2b=b2b,
        w3a=w3a_half.astype(bf), w3b=w3b_half.astype(bf), b3=b3,
    )


def critic_forward(state, action, prepared, *, tb=DEFAULT_TB):
    """state: (B, INPUT_DIM); action: (B, ACTION_DIM). Returns (q1, q2), each (B, 1)."""
    p = prepared
    B = state.shape[0]

    # ---- batch tiling ------------------------------------------------------
    tb = max(8, _round_up(int(tb), 8))
    # Cap TB at ceil(B/2) (rounded to 8): large batches always give >= 2 grid
    # tiles so the "parallel" batch axis can shard across both TCs on v7x.
    TB = min(tb, _round_up(B, 8), _round_up(-(-B // 2), 8))
    Bp = _round_up(B, TB)
    grid = (Bp // TB,)

    # Fused state||action operand, row-padded to Bp and K-padded to 16, bf16.
    sa = jnp.concatenate([state.astype(jnp.float32),
                          action.astype(jnp.float32)], axis=1)        # (B, 10)
    sa = jnp.pad(sa, ((0, Bp - B), (0, SA_PAD - IN_TOTAL)))           # (Bp, 16)
    sa = sa.astype(jnp.bfloat16)

    def rows(shape):          # row-tiled operand
        return pl.BlockSpec(shape, lambda i: (i, 0))

    def resident(arr):        # constant index_map -> stays resident in VMEM
        return pl.BlockSpec(arr.shape, lambda i: (0, 0))

    weights = (p["w1"], p["b1"], p["w2a"], p["b2a"], p["w2b"], p["b2b"],
               p["w3a"], p["w3b"], p["b3"])
    in_specs = [rows((TB, SA_PAD))] + [resident(w) for w in weights]

    # Advisory cost hint so XLA can schedule around the custom call.
    flops = 2 * Bp * (SA_PAD * 2 * HIDDEN + 2 * HIDDEN * HIDDEN + 2 * HIDDEN * 2)
    w_bytes = sum(int(w.size) * w.dtype.itemsize for w in weights)
    cost = pl.CostEstimate(
        flops=flops,
        transcendentals=Bp * 4 * HIDDEN,
        bytes_accessed=w_bytes + 2 * Bp * SA_PAD + 4 * Bp * 2,
    )

    q = pl.pallas_call(
        _critic_kernel,
        out_shape=jax.ShapeDtypeStruct((Bp, 2), jnp.float32),
        grid=grid,
        in_specs=in_specs,
        out_specs=rows((TB, 2)),
        compiler_params=pltpu.CompilerParams(
            dimension_semantics=("parallel",),
            vmem_limit_bytes=64 * 1024 * 1024),
        cost_estimate=cost,
    )(sa, *weights)

    q = q[:B]
    return q[:, 0:1], q[:, 1:2]


def init_critic_params(key, input_dim=INPUT_DIM, action_dim=ACTION_DIM,
                       hidden=HIDDEN):
    """Deterministic init mimicking PyTorch nn.Linear default U[-1/sqrt(fan_in), ...]."""
    in_dim = input_dim + action_dim
    layer_dims = [(in_dim, hidden), (hidden, hidden), (hidden, 1)]

    params = []
    for _ in range(2):  # q1, q2
        for (fan_in, fan_out) in layer_dims:
            key, kw, kb = jax.random.split(key, 3)
            bound = 1.0 / math.sqrt(fan_in)
            w = jax.random.uniform(kw, (fan_in, fan_out), jnp.float32,
                                   minval=-bound, maxval=bound)
            b = jax.random.uniform(kb, (1, fan_out), jnp.float32,
                                   minval=-bound, maxval=bound)
            params.append(w)
            params.append(b)
    return tuple(params)


if __name__ == "__main__":
    key = jax.random.PRNGKey(0)
    kp, ks, ka = jax.random.split(key, 3)

    params = init_critic_params(kp)
    prepared = prepare_critic_params(params)   # hoisted one-time fusion

    def ref_forward(state, action):
        sa = jnp.concatenate([state, action], axis=1)
        (w1a, b1a, w2a, b2a, w3a, b3a,
         w1b, b1b, w2b, b2b, w3b, b3b) = params
        r1 = jnp.tanh(jnp.tanh(sa @ w1a + b1a) @ w2a + b2a) @ w3a + b3a
        r2 = jnp.tanh(jnp.tanh(sa @ w1b + b1b) @ w2b + b2b) @ w3b + b3b
        return r1, r2

    # bf16 matmul inputs => relax tolerance vs. the f32 reference (~1e-2 scale).
    TOL = 5e-2

    # Small single-tile case.
    batch = 8
    state = jax.random.normal(ks, (batch, INPUT_DIM), jnp.float32)
    action = jax.random.uniform(ka, (batch, ACTION_DIM), jnp.float32,
                                minval=-1.0, maxval=1.0)
    q1, q2 = critic_forward(state, action, prepared)
    jax.block_until_ready((q1, q2))
    r1, r2 = ref_forward(state, action)
    assert q1.shape == (batch, 1) and q2.shape == (batch, 1)
    assert jnp.allclose(q1, r1, atol=TOL), "q1 mismatch (single tile)"
    assert jnp.allclose(q2, r2, atol=TOL), "q2 mismatch (single tile)"

    # Multi-tile + padded-remainder case (small tile to exercise the grid).
    batch2 = 200
    ks2, ka2 = jax.random.split(jax.random.PRNGKey(1))
    state2 = jax.random.normal(ks2, (batch2, INPUT_DIM), jnp.float32)
    action2 = jax.random.uniform(ka2, (batch2, ACTION_DIM), jnp.float32,
                                 minval=-1.0, maxval=1.0)
    q1b, q2b = critic_forward(state2, action2, prepared, tb=64)
    jax.block_until_ready((q1b, q2b))
    r1b, r2b = ref_forward(state2, action2)
    assert q1b.shape == (batch2, 1) and q2b.shape == (batch2, 1)
    assert jnp.allclose(q1b, r1b, atol=TOL), "q1 mismatch (multi tile)"
    assert jnp.allclose(q2b, r2b, atol=TOL), "q2 mismatch (multi tile)"

    print("KERNEL_OK")
</pallas_src>

<mosaic_0001>
module attributes {stable_mosaic.version = 11 : i64} {
  func.func @_critic_kernel(%arg0: i32, %arg1: memref<8x16xbf16, #tpu.memory_space<vmem>>, %arg2: memref<16x512xbf16, #tpu.memory_space<vmem>>, %arg3: memref<1x512xf32, #tpu.memory_space<vmem>>, %arg4: memref<256x256xbf16, #tpu.memory_space<vmem>>, %arg5: memref<1x256xf32, #tpu.memory_space<vmem>>, %arg6: memref<256x256xbf16, #tpu.memory_space<vmem>>, %arg7: memref<1x256xf32, #tpu.memory_space<vmem>>, %arg8: memref<256x2xbf16, #tpu.memory_space<vmem>>, %arg9: memref<256x2xbf16, #tpu.memory_space<vmem>>, %arg10: memref<1x2xf32, #tpu.memory_space<vmem>>, %arg11: memref<8x2xf32, #tpu.memory_space<vmem>>) attributes {dimension_semantics = [#tpu.dimension_semantics<parallel>], iteration_bounds = array<i64: 1>, scalar_prefetch = 0 : i64, scratch_operands = 0 : i64, tpu.core_type = #tpu.core_type<tc>, window_params = [{transform_indices = @transform_0, window_bounds = array<i64: 8, 16>}, {pipeline_mode = #tpu.pipeline_mode<synchronous>, transform_indices = @transform_1, window_bounds = array<i64: 16, 512>}, {pipeline_mode = #tpu.pipeline_mode<synchronous>, transform_indices = @transform_2, window_bounds = array<i64: 1, 512>}, {pipeline_mode = #tpu.pipeline_mode<synchronous>, transform_indices = @transform_3, window_bounds = array<i64: 256, 256>}, {pipeline_mode = #tpu.pipeline_mode<synchronous>, transform_indices = @transform_4, window_bounds = array<i64: 1, 256>}, {pipeline_mode = #tpu.pipeline_mode<synchronous>, transform_indices = @transform_5, window_bounds = array<i64: 256, 256>}, {pipeline_mode = #tpu.pipeline_mode<synchronous>, transform_indices = @transform_6, window_bounds = array<i64: 1, 256>}, {pipeline_mode = #tpu.pipeline_mode<synchronous>, transform_indices = @transform_7, window_bounds = array<i64: 256, 2>}, {pipeline_mode = #tpu.pipeline_mode<synchronous>, transform_indices = @transform_8, window_bounds = array<i64: 256, 2>}, {pipeline_mode = #tpu.pipeline_mode<synchronous>, transform_indices = @transform_9, window_bounds = array<i64: 1, 2>}, {transform_indices = @transform_10, window_bounds = array<i64: 8, 2>}]} {
    %c0 = arith.constant 0 : index
    %c0_0 = arith.constant 0 : index
    %0 = vector.load %arg1[%c0, %c0_0] : memref<8x16xbf16, #tpu.memory_space<vmem>>, vector<8x16xbf16>
    %c0_1 = arith.constant 0 : index
    %c0_2 = arith.constant 0 : index
    %1 = vector.load %arg2[%c0_1, %c0_2] : memref<16x512xbf16, #tpu.memory_space<vmem>>, vector<16x512xbf16>
    %cst = arith.constant dense<0.000000e+00> : vector<8x512xf32>
    %2 = tpu.matmul %0, %1, %cst {dimension_numbers = #tpu.dot_dimension_numbers<[1], [0], [0], [1], [0, 0, 1, 1], [], []>} : vector<8x16xbf16>, vector<16x512xbf16>, vector<8x512xf32> -> vector<8x512xf32>
    %c0_3 = arith.constant 0 : index
    %c0_4 = arith.constant 0 : index
    %3 = vector.load %arg3[%c0_3, %c0_4] : memref<1x512xf32, #tpu.memory_space<vmem>>, vector<1x512xf32>
    %4 = vector.broadcast %3 : vector<1x512xf32> to vector<8x512xf32>
    %5 = arith.addf %2, %4 : vector<8x512xf32>
    %6 = math.tanh %5 : vector<8x512xf32>
    %7 = vector.extract_strided_slice %6 {offsets = [0, 0], sizes = [8, 256], strides = [1, 1]} : vector<8x512xf32> to vector<8x256xf32>
    %8 = arith.truncf %7 : vector<8x256xf32> to vector<8x256xbf16>
    %9 = vector.extract_strided_slice %6 {offsets = [0, 256], sizes = [8, 256], strides = [1, 1]} : vector<8x512xf32> to vector<8x256xf32>
    %10 = arith.truncf %9 : vector<8x256xf32> to vector<8x256xbf16>
    %c0_5 = arith.constant 0 : index
    %c0_6 = arith.constant 0 : index
    %11 = vector.load %arg4[%c0_5, %c0_6] : memref<256x256xbf16, #tpu.memory_space<vmem>>, vector<256x256xbf16>
    %cst_7 = arith.constant dense<0.000000e+00> : vector<8x256xf32>
    %12 = tpu.matmul %8, %11, %cst_7 {dimension_numbers = #tpu.dot_dimension_numbers<[1], [0], [0], [1], [0, 0, 1, 1], [], []>} : vector<8x256xbf16>, vector<256x256xbf16>, vector<8x256xf32> -> vector<8x256xf32>
    %c0_8 = arith.constant 0 : index
    %c0_9 = arith.constant 0 : index
    %13 = vector.load %arg5[%c0_8, %c0_9] : memref<1x256xf32, #tpu.memory_space<vmem>>, vector<1x256xf32>
    %14 = vector.broadcast %13 : vector<1x256xf32> to vector<8x256xf32>
    %15 = arith.addf %12, %14 : vector<8x256xf32>
    %16 = math.tanh %15 : vector<8x256xf32>
    %17 = arith.truncf %16 : vector<8x256xf32> to vector<8x256xbf16>
    %c0_10 = arith.constant 0 : index
    %c0_11 = arith.constant 0 : index
    %18 = vector.load %arg6[%c0_10, %c0_11] : memref<256x256xbf16, #tpu.memory_space<vmem>>, vector<256x256xbf16>
    %cst_12 = arith.constant dense<0.000000e+00> : vector<8x256xf32>
    %19 = tpu.matmul %10, %18, %cst_12 {dimension_numbers = #tpu.dot_dimension_numbers<[1], [0], [0], [1], [0, 0, 1, 1], [], []>} : vector<8x256xbf16>, vector<256x256xbf16>, vector<8x256xf32> -> vector<8x256xf32>
    %c0_13 = arith.constant 0 : index
    %c0_14 = arith.constant 0 : index
    %20 = vector.load %arg7[%c0_13, %c0_14] : memref<1x256xf32, #tpu.memory_space<vmem>>, vector<1x256xf32>
    %21 = vector.broadcast %20 : vector<1x256xf32> to vector<8x256xf32>
    %22 = arith.addf %19, %21 : vector<8x256xf32>
    %23 = math.tanh %22 : vector<8x256xf32>
    %24 = arith.truncf %23 : vector<8x256xf32> to vector<8x256xbf16>
    %c0_15 = arith.constant 0 : index
    %c0_16 = arith.constant 0 : index
    %25 = vector.load %arg8[%c0_15, %c0_16] : memref<256x2xbf16, #tpu.memory_space<vmem>>, vector<256x2xbf16>
    %cst_17 = arith.constant dense<0.000000e+00> : vector<8x2xf32>
    %26 = tpu.matmul %17, %25, %cst_17 {dimension_numbers = #tpu.dot_dimension_numbers<[1], [0], [0], [1], [0, 0, 1, 1], [], []>} : vector<8x256xbf16>, vector<256x2xbf16>, vector<8x2xf32> -> vector<8x2xf32>
    %c0_18 = arith.constant 0 : index
    %c0_19 = arith.constant 0 : index
    %27 = vector.load %arg9[%c0_18, %c0_19] : memref<256x2xbf16, #tpu.memory_space<vmem>>, vector<256x2xbf16>
    %cst_20 = arith.constant dense<0.000000e+00> : vector<8x2xf32>
    %28 = tpu.matmul %24, %27, %cst_20 {dimension_numbers = #tpu.dot_dimension_numbers<[1], [0], [0], [1], [0, 0, 1, 1], [], []>} : vector<8x256xbf16>, vector<256x2xbf16>, vector<8x2xf32> -> vector<8x2xf32>
    %29 = arith.addf %26, %28 : vector<8x2xf32>
    %c0_21 = arith.constant 0 : index
    %c0_22 = arith.constant 0 : index
    %30 = vector.load %arg10[%c0_21, %c0_22] : memref<1x2xf32, #tpu.memory_space<vmem>>, vector<1x2xf32>
    %31 = vector.broadcast %30 : vector<1x2xf32> to vector<8x2xf32>
    %32 = arith.addf %29, %31 : vector<8x2xf32>
    %c0_23 = arith.constant 0 : index
    %c0_24 = arith.constant 0 : index
    %33 = vector.load %arg11[%c0_23, %c0_24] : memref<8x2xf32, #tpu.memory_space<vmem>>, vector<8x2xf32>
    tpu.vector_store %arg11[%c0_23, %c0_24], %32 {strides = array<i32>} : memref<8x2xf32, #tpu.memory_space<vmem>>, vector<8x2xf32>,
    return
  }
  func.func @transform_0(%arg0: i32) -> (i32, i32) {
    %c0_i32 = arith.constant 0 : i32
    %c0_i32_0 = arith.constant 0 : i32
    return %arg0, %c0_i32 : i32, i32
  }
  func.func @transform_1(%arg0: i32) -> (i32, i32) {
    %c0_i32 = arith.constant 0 : i32
    %c0_i32_0 = arith.constant 0 : i32
    %c0_i32_1 = arith.constant 0 : i32
    return %c0_i32, %c0_i32_0 : i32, i32
  }
  func.func @transform_2(%arg0: i32) -> (i32, i32) {
    %c0_i32 = arith.constant 0 : i32
    %c0_i32_0 = arith.constant 0 : i32
    %c0_i32_1 = arith.constant 0 : i32
    return %c0_i32, %c0_i32_0 : i32, i32
  }
  func.func @transform_3(%arg0: i32) -> (i32, i32) {
    %c0_i32 = arith.constant 0 : i32
    %c0_i32_0 = arith.constant 0 : i32
    %c0_i32_1 = arith.constant 0 : i32
    return %c0_i32, %c0_i32_0 : i32, i32
  }
  func.func @transform_4(%arg0: i32) -> (i32, i32) {
    %c0_i32 = arith.constant 0 : i32
    %c0_i32_0 = arith.constant 0 : i32
    %c0_i32_1 = arith.constant 0 : i32
    return %c0_i32, %c0_i32_0 : i32, i32
  }
  func.func @transform_5(%arg0: i32) -> (i32, i32) {
    %c0_i32 = arith.constant 0 : i32
    %c0_i32_0 = arith.constant 0 : i32
    %c0_i32_1 = arith.constant 0 : i32
    return %c0_i32, %c0_i32_0 : i32, i32
  }
  func.func @transform_6(%arg0: i32) -> (i32, i32) {
    %c0_i32 = arith.constant 0 : i32
    %c0_i32_0 = arith.constant 0 : i32
    %c0_i32_1 = arith.constant 0 : i32
    return %c0_i32, %c0_i32_0 : i32, i32
  }
  func.func @transform_7(%arg0: i32) -> (i32, i32) {
    %c0_i32 = arith.constant 0 : i32
    %c0_i32_0 = arith.constant 0 : i32
    %c0_i32_1 = arith.constant 0 : i32
    return %c0_i32, %c0_i32_0 : i32, i32
  }
  func.func @transform_8(%arg0: i32) -> (i32, i32) {
    %c0_i32 = arith.constant 0 : i32
    %c0_i32_0 = arith.constant 0 : i32
    %c0_i32_1 = arith.constant 0 : i32
    return %c0_i32, %c0_i32_0 : i32, i32
  }
  func.func @transform_9(%arg0: i32) -> (i32, i32) {
    %c0_i32 = arith.constant 0 : i32
    %c0_i32_0 = arith.constant 0 : i32
    %c0_i32_1 = arith.constant 0 : i32
    return %c0_i32, %c0_i32_0 : i32, i32
  }
  func.func @transform_10(%arg0: i32) -> (i32, i32) {
    %c0_i32 = arith.constant 0 : i32
    %c0_i32_0 = arith.constant 0 : i32
    return %arg0, %c0_i32 : i32, i32
  }
}

</mosaic_0001>

<llo_original>
// kernel: tpu_custom_call.1
$region0: #{tpu_custom_call.1}
  #allocation0 [shape = 'u32[]', space=smem, size = 0x4, offset = 0x4, fixed_abs, tag = 'smem constant byte address 0x4 - core index']
  #allocation1 [shape = 'u32[144,128]{1,0:T(1,128)}', space=vmem, size = 0x12000, scoped, tag = 'internal scratch']
  %s0 = inlined_call_operand.hbm [shape: bf16[8,16], index: 0, kind: input, shape index: {}]
  %s1 = inlined_call_operand.hbm [shape: bf16[16,512], index: 1, kind: input, shape index: {}]
  %s2 = inlined_call_operand.hbm [shape: f32[1,512], index: 2, kind: input, shape index: {}]
  %s3 = inlined_call_operand.hbm [shape: bf16[256,256], index: 3, kind: input, shape index: {}]
  %s4 = inlined_call_operand.hbm [shape: f32[1,256], index: 4, kind: input, shape index: {}]
  %s5 = inlined_call_operand.hbm [shape: bf16[256,256], index: 5, kind: input, shape index: {}]
  %s6 = inlined_call_operand.hbm [shape: f32[1,256], index: 6, kind: input, shape index: {}]
  %s7 = inlined_call_operand.hbm [shape: bf16[256,2], index: 7, kind: input, shape index: {}]
  %s8 = inlined_call_operand.hbm [shape: bf16[256,2], index: 8, kind: input, shape index: {}]
  %s9 = inlined_call_operand.hbm [shape: f32[1,2], index: 9, kind: input, shape index: {}]
  %s10 = inlined_call_operand.hbm [shape: f32[8,2], index: 10, kind: output, shape index: {}]
  %s11 = sld [smem:[#allocation0]]
  $region90: #{tpu_custom_call.1} parent=0
    _
  %s13 = ssub.s32 1, %s11
  %s14 = scalar_select 0, %s13, %s11
  $region1: #{tpu_custom_call.1} parent=0
    #allocation2 [shape = 'u8[2048]{0}', space=vmem, size = 0x800, scoped, tag = 'input window, operand 0, single buffered']
    #allocation3 [shape = 's32[1]{0}', space=sflag, size = 0x4, scoped, tag = 'scoped memory for tpu_custom_call.1']
    #allocation4 [shape = 's32[1]{0}', space=sflag, size = 0x4, scoped, tag = 'scoped memory for tpu_custom_call.1']
    #allocation5 [shape = 'u8[16384]{0}', space=vmem, size = 0x4000, scoped, tag = 'input window, operand 1, single buffered']
    #allocation6 [shape = 's32[1]{0}', space=sflag, size = 0x4, scoped, tag = 'scoped memory for tpu_custom_call.1']
    #allocation7 [shape = 'u8[2048]{0}', space=vmem, size = 0x800, scoped, tag = 'input window, operand 2, single buffered']
    #allocation8 [shape = 'u8[131072]{0}', space=vmem, size = 0x20000, scoped, tag = 'input window, operand 3, single buffered']
    #allocation9 [shape = 's32[1]{0}', space=sflag, size = 0x4, scoped, tag = 'scoped memory for tpu_custom_call.1']
    #allocation10 [shape = 'u8[1024]{0}', space=vmem, size = 0x400, scoped, tag = 'input window, operand 4, single buffered']
    #allocation11 [shape = 'u8[131072]{0}', space=vmem, size = 0x20000, scoped, tag = 'input window, operand 5, single buffered']
    #allocation12 [shape = 's32[1]{0}', space=sflag, size = 0x4, scoped, tag = 'scoped memory for tpu_custom_call.1']
    #allocation13 [shape = 'u8[1024]{0}', space=vmem, size = 0x400, scoped, tag = 'input window, operand 6, single buffered']
    #allocation14 [shape = 'u8[65536]{0}', space=vmem, size = 0x10000, scoped, tag = 'input window, operand 7, single buffered']
    #allocation15 [shape = 's32[1]{0}', space=sflag, size = 0x4, scoped, tag = 'scoped memory for tpu_custom_call.1']
    #allocation16 [shape = 'u8[65536]{0}', space=vmem, size = 0x10000, scoped, tag = 'input window, operand 8, single buffered']
    #allocation17 [shape = 'u8[512]{0}', space=vmem, size = 0x400, scoped, tag = 'input window, operand 9, single buffered']
    #allocation18 [shape = 's32[1]{0}', space=sflag, size = 0x4, scoped, tag = 'scoped memory for tpu_custom_call.1']
    #allocation19 [shape = 'u8[4096]{0}', space=vmem, size = 0x1000, scoped, tag = 'output window, operand 0, single buffered']
    %15 = vsyncpa [#allocation3], 0
    %16 = vsyncpa [#allocation6], 0
    %17 = vsyncpa [#allocation9], 0
    %18 = vsyncpa [#allocation12], 0
    %19 = vsyncpa [#allocation15], 0
    %20 = vsyncpa [#allocation18], 0
    %21 = vsyncpa [#allocation4], 0
    // Predicated region
    $region2: #{tpu_custom_call.1} parent=1 // pred_check
      _
    $region3: #{tpu_custom_call.1} parent=1 // pred_check_branch
      %23 = sbr.rel (0) target = $region5
    $region4: #{tpu_custom_call.1} parent=1 // pred_region
      %s25 = ssub.s32 64, 64
      %26 = vsyncadd [#allocation3], %s25
      %s28 = sshll.u32 [#allocation2], 4
      %s29 = int_to_ptr.vmem [resolvable:$true] %s28
      %31 = dma.hbm_to_vmem [thread:$0]  %s0, 64, %s29, [#allocation3]
    $region5: #{tpu_custom_call.1} parent=1 // pred_fallthru
      _
    // Predicated region
    $region6: #{tpu_custom_call.1} parent=1 // pred_check
      _
    $region7: #{tpu_custom_call.1} parent=1 // pred_check_branch
      %33 = sbr.rel (0) target = $region9
    $region8: #{tpu_custom_call.1} parent=1 // pred_region
      %s35 = ssub.s32 512, 512
      %36 = vsyncadd [#allocation6], %s35
      %s37 = sshll.u32 [#allocation5], 4
      %s38 = int_to_ptr.vmem [resolvable:$true] %s37
      %43 = dma.hbm_to_vmem [thread:$0]  %s1, 512, %s38, [#allocation6], 256, 256, 16
    $region9: #{tpu_custom_call.1} parent=1 // pred_fallthru
      _
    // Predicated region
    $region10: #{tpu_custom_call.1} parent=1 // pred_check
      _
    $region11: #{tpu_custom_call.1} parent=1 // pred_check_branch
      %45 = sbr.rel (0) target = $region13
    $region12: #{tpu_custom_call.1} parent=1 // pred_region
      %s47 = ssub.s32 64, 64
      %48 = vsyncadd [#allocation6], %s47
      %s50 = sshll.u32 [#allocation7], 4
      %s51 = int_to_ptr.vmem [resolvable:$true] %s50
      %53 = dma.hbm_to_vmem [thread:$0]  %s2, 64, %s51, [#allocation6]
    $region13: #{tpu_custom_call.1} parent=1 // pred_fallthru
      _
    // Predicated region
    $region14: #{tpu_custom_call.1} parent=1 // pred_check
      _
    $region15: #{tpu_custom_call.1} parent=1 // pred_check_branch
      %55 = sbr.rel (0) target = $region17
    $region16: #{tpu_custom_call.1} parent=1 // pred_region
      %s57 = ssub.s32 4096, 4096
      %58 = vsyncadd [#allocation9], %s57
      %s59 = sshll.u32 [#allocation8], 4
      %s60 = int_to_ptr.vmem [resolvable:$true] %s59
      %65 = dma.hbm_to_vmem [thread:$0]  %s3, 4096, %s60, [#allocation9], 128, 128, 8
    $region17: #{tpu_custom_call.1} parent=1 // pred_fallthru
      _
    // Predicated region
    $region18: #{tpu_custom_call.1} parent=1 // pred_check
      _
    $region19: #{tpu_custom_call.1} parent=1 // pred_check_branch
      %67 = sbr.rel (0) target = $region21
    $region20: #{tpu_custom_call.1} parent=1 // pred_region
      %s69 = ssub.s32 32, 32
      %70 = vsyncadd [#allocation9], %s69
      %s72 = sshll.u32 [#allocation10], 4
      %s73 = int_to_ptr.vmem [resolvable:$true] %s72
      %75 = dma.hbm_to_vmem [thread:$0]  %s4, 32, %s73, [#allocation9]
    $region21: #{tpu_custom_call.1} parent=1 // pred_fallthru
      _
    // Predicated region
    $region22: #{tpu_custom_call.1} parent=1 // pred_check
      _
    $region23: #{tpu_custom_call.1} parent=1 // pred_check_branch
      %77 = sbr.rel (0) target = $region25
    $region24: #{tpu_custom_call.1} parent=1 // pred_region
      %s79 = ssub.s32 4096, 4096
      %80 = vsyncadd [#allocation12], %s79
      %s81 = sshll.u32 [#allocation11], 4
      %s82 = int_to_ptr.vmem [resolvable:$true] %s81
      %87 = dma.hbm_to_vmem [thread:$0]  %s5, 4096, %s82, [#allocation12], 128, 128, 8
    $region25: #{tpu_custom_call.1} parent=1 // pred_fallthru
      _
    // Predicated region
    $region26: #{tpu_custom_call.1} parent=1 // pred_check
      _
    $region27: #{tpu_custom_call.1} parent=1 // pred_check_branch
      %89 = sbr.rel (0) target = $region29
    $region28: #{tpu_custom_call.1} parent=1 // pred_region
      %s91 = ssub.s32 32, 32
      %92 = vsyncadd [#allocation12], %s91
      %s94 = sshll.u32 [#allocation13], 4
      %s95 = int_to_ptr.vmem [resolvable:$true] %s94
      %97 = dma.hbm_to_vmem [thread:$0]  %s6, 32, %s95, [#allocation12]
    $region29: #{tpu_custom_call.1} parent=1 // pred_fallthru
      _
    // Predicated region
    $region30: #{tpu_custom_call.1} parent=1 // pred_check
      _
    $region31: #{tpu_custom_call.1} parent=1 // pred_check_branch
      %99 = sbr.rel (0) target = $region33
    $region32: #{tpu_custom_call.1} parent=1 // pred_region
      %s101 = ssub.s32 2048, 2048
      %102 = vsyncadd [#allocation15], %s101
      %s103 = sshll.u32 [#allocation14], 4
      %s104 = int_to_ptr.vmem [resolvable:$true] %s103
      %109 = dma.hbm_to_vmem [thread:$0]  %s7, 2048, %s104, [#allocation15], 64, 64, 4
    $region33: #{tpu_custom_call.1} parent=1 // pred_fallthru
      _
    // Predicated region
    $region34: #{tpu_custom_call.1} parent=1 // pred_check
      _
    $region35: #{tpu_custom_call.1} parent=1 // pred_check_branch
      %111 = sbr.rel (0) target = $region37
    $region36: #{tpu_custom_call.1} parent=1 // pred_region
      %s113 = ssub.s32 2048, 2048
      %114 = vsyncadd [#allocation15], %s113
      %s115 = sshll.u32 [#allocation16], 4
      %s116 = int_to_ptr.vmem [resolvable:$true] %s115
      %121 = dma.hbm_to_vmem [thread:$0]  %s8, 2048, %s116, [#allocation15], 64, 64, 4
    $region37: #{tpu_custom_call.1} parent=1 // pred_fallthru
      _
    // Predicated region
    $region38: #{tpu_custom_call.1} parent=1 // pred_check
      _
    $region39: #{tpu_custom_call.1} parent=1 // pred_check_branch
      %123 = sbr.rel (0) target = $region41
    $region40: #{tpu_custom_call.1} parent=1 // pred_region
      %s125 = ssub.s32 16, 16
      %126 = vsyncadd [#allocation18], %s125
      %s128 = sshll.u32 [#allocation17], 4
      %s129 = int_to_ptr.vmem [resolvable:$true] %s128
      %131 = dma.hbm_to_vmem [thread:$0]  %s9, 16, %s129, [#allocation18]
    $region41: #{tpu_custom_call.1} parent=1 // pred_fallthru
      _
    // Predicated region
    $region42: #{tpu_custom_call.1} parent=1 // pred_check
      _
    $region43: #{tpu_custom_call.1} parent=1 // pred_check_branch
      %133 = sbr.rel (0) target = $region45
    $region44: #{tpu_custom_call.1} parent=1 // pred_region
      %134 = dma.done [#allocation3], 64
    $region45: #{tpu_custom_call.1} parent=1 // pred_fallthru
      _
    // Predicated region
    $region46: #{tpu_custom_call.1} parent=1 // pred_check
      _
    $region47: #{tpu_custom_call.1} parent=1 // pred_check_branch
      %136 = sbr.rel (0) target = $region49
    $region48: #{tpu_custom_call.1} parent=1 // pred_region
      %137 = dma.done [#allocation6], 512
    $region49: #{tpu_custom_call.1} parent=1 // pred_fallthru
      _
    // Predicated region
    $region50: #{tpu_custom_call.1} parent=1 // pred_check
      _
    $region51: #{tpu_custom_call.1} parent=1 // pred_check_branch
      %139 = sbr.rel (0) target = $region53
    $region52: #{tpu_custom_call.1} parent=1 // pred_region
      %140 = dma.done [#allocation6], 64
    $region53: #{tpu_custom_call.1} parent=1 // pred_fallthru
      _
    // Predicated region
    $region54: #{tpu_custom_call.1} parent=1 // pred_check
      _
    $region55: #{tpu_custom_call.1} parent=1 // pred_check_branch
      %142 = sbr.rel (0) target = $region57
    $region56: #{tpu_custom_call.1} parent=1 // pred_region
      %143 = dma.done [#allocation9], 4096
    $region57: #{tpu_custom_call.1} parent=1 // pred_fallthru
      _
    // Predicated region
    $region58: #{tpu_custom_call.1} parent=1 // pred_check
      _
    $region59: #{tpu_custom_call.1} parent=1 // pred_check_branch
      %145 = sbr.rel (0) target = $region61
    $region60: #{tpu_custom_call.1} parent=1 // pred_region
      %146 = dma.done [#allocation9], 32
    $region61: #{tpu_custom_call.1} parent=1 // pred_fallthru
      _
    // Predicated region
    $region62: #{tpu_custom_call.1} parent=1 // pred_check
      _
    $region63: #{tpu_custom_call.1} parent=1 // pred_check_branch
      %148 = sbr.rel (0) target = $region65
    $region64: #{tpu_custom_call.1} parent=1 // pred_region
      %149 = dma.done [#allocation12], 4096
    $region65: #{tpu_custom_call.1} parent=1 // pred_fallthru
      _
    // Predicated region
    $region66: #{tpu_custom_call.1} parent=1 // pred_check
      _
    $region67: #{tpu_custom_call.1} parent=1 // pred_check_branch
      %151 = sbr.rel (0) target = $region69
    $region68: #{tpu_custom_call.1} parent=1 // pred_region
      %152 = dma.done [#allocation12], 32
    $region69: #{tpu_custom_call.1} parent=1 // pred_fallthru
      _
    // Predicated region
    $region70: #{tpu_custom_call.1} parent=1 // pred_check
      _
    $region71: #{tpu_custom_call.1} parent=1 // pred_check_branch
      %154 = sbr.rel (0) target = $region73
    $region72: #{tpu_custom_call.1} parent=1 // pred_region
      %155 = dma.done [#allocation15], 2048
    $region73: #{tpu_custom_call.1} parent=1 // pred_fallthru
      _
    // Predicated region
    $region74: #{tpu_custom_call.1} parent=1 // pred_check
      _
    $region75: #{tpu_custom_call.1} parent=1 // pred_check_branch
      %157 = sbr.rel (0) target = $region77
    $region76: #{tpu_custom_call.1} parent=1 // pred_region
      %158 = dma.done [#allocation15], 2048
    $region77: #{tpu_custom_call.1} parent=1 // pred_fallthru
      _
    // Predicated region
    $region78: #{tpu_custom_call.1} parent=1 // pred_check
      _
    $region79: #{tpu_custom_call.1} parent=1 // pred_check_branch
      %160 = sbr.rel (0) target = $region81
    $region80: #{tpu_custom_call.1} parent=1 // pred_region
      %161 = dma.done [#allocation18], 16
    $region81: #{tpu_custom_call.1} parent=1 // pred_fallthru
      _
    %v163 = vld [vmem:[#allocation2] sm:$0xf]
    %v164 = vld [vmem:[#allocation5] sm:$0xff]
    %v165 = vld [vmem:[#allocation5 + $0x8] sm:$0xff]
    %v166 = vld [vmem:[#allocation5 + $0x10] sm:$0xff]
    %v167 = vld [vmem:[#allocation5 + $0x18] sm:$0xff]
    %v168 = vld [vmem:[#allocation7] sm:$0xf]
    %v170 = vlaneseq
    %v171 = vshrl.u32 %v170, 7
    %v172 = vsub.s32 0, %v171
    %v173 = vrot.slane %v168, %v172
    %v174 = vlaneseq
    %v175 = vshrl.u32 %v174, 7
    %v176 = vsub.s32 1, %v175
    %v177 = vrot.slane %v168, %v176
    %v178 = vlaneseq
    %v179 = vshrl.u32 %v178, 7
    %v180 = vsub.s32 2, %v179
    %v181 = vrot.slane %v168, %v180
    %v182 = vlaneseq
    %v183 = vshrl.u32 %v182, 7
    %v184 = vsub.s32 3, %v183
    %v185 = vrot.slane %v168, %v184
    %v194 = vunpack.c.l.b16 %v164
    %v195 = vunpack.c.h.b16 %v164
    %v196 = vunpack.c.l.b16 %v165
    %v197 = vunpack.c.h.b16 %v165
    %v198 = vunpack.c.l.b16 %v166
    %v199 = vunpack.c.h.b16 %v166
    %v200 = vunpack.c.l.b16 %v167
    %v201 = vunpack.c.h.b16 %v167
    %v202 = vpack.c.b16 %v198, %v194
    %v203 = vpack.c.b16 %v199, %v195
    %v204 = vpack.c.b16 %v200, %v196
    %v205 = vpack.c.b16 %v201, %v197
    %vm210 = vcmask 130048
    %v212 = vsel %vm210, %v163, 0
    %214 = vmatprep.subr.bf16.mxu0 %v203
    %215 = vmatpush1.bf16.msra.mxu0 %v202
    %216 = vmatprep.subr.bf16.mxu0 0
    %217 = vmatpush1.bf16.msra.mxu0 0
    %218 = vmatprep.subr.bf16.mxu0 0
    %219 = vmatpush1.bf16.msra.mxu0 0
    %220 = vmatprep.subr.bf16.mxu0 0
    %221 = vmatpush1.bf16.msra.mxu0 0
    %222 = vmatprep.subr.bf16.mxu0 0
    %223 = vmatpush1.bf16.msra.mxu0 0
    %224 = vmatprep.subr.bf16.mxu0 0
    %225 = vmatpush1.bf16.msra.mxu0 0
    %226 = vmatprep.subr.bf16.mxu0 0
    %227 = vmatpush1.bf16.msra.mxu0 0
    %228 = vmatprep.subr.bf16.mxu0 0
    %229 = vmatpush1.bf16.msra.mxu0 0
    %230 = vmatprep.subr.bf16.mxu0 0
    %231 = vmatpush1.bf16.msra.mxu0 0
    %232 = vmatprep.subr.bf16.mxu0 0
    %233 = vmatpush1.bf16.msra.mxu0 0
    %234 = vmatprep.subr.bf16.mxu0 0
    %235 = vmatpush1.bf16.msra.mxu0 0
    %236 = vmatprep.subr.bf16.mxu0 0
    %237 = vmatpush1.bf16.msra.mxu0 0
    %238 = vmatprep.subr.bf16.mxu0 0
    %239 = vmatpush1.bf16.msra.mxu0 0
    %240 = vmatprep.subr.bf16.mxu0 0
    %241 = vmatpush1.bf16.msra.mxu0 0
    %242 = vmatprep.subr.bf16.mxu0 0
    %243 = vmatpush1.bf16.msra.mxu0 0
    %244 = vmatprep.subr.bf16.mxu0 0
    %245 = vmatpush1.bf16.msra.mxu0 0
    %246 = vmatprep.mubr.bf16.mxu0 0
    %247 = vmatmul.mubr.bf16.gmra.mrb[0].mxu0 %v212
    %v248 = vpop.f32.mrb[0].mxu0
    %v249 = vadd.f32 %v173, %v248
    %v250 = vpop.f32.mrb[0].mxu0
    %v251 = vadd.f32 %v177, %v250
    %v252 = vpop.f32.mrb[0].mxu0
    %v253 = vpop.f32.mrb[0].mxu0
    %254 = vdwg.mxu0
    %255 = vmatprep.subr.bf16.mxu0 %v205
    %256 = vmatpush1.bf16.msra.mxu0 %v204
    %257 = vmatprep.subr.bf16.mxu0 0
    %258 = vmatpush1.bf16.msra.mxu0 0
    %259 = vmatprep.subr.bf16.mxu0 0
    %260 = vmatpush1.bf16.msra.mxu0 0
    %261 = vmatprep.subr.bf16.mxu0 0
    %262 = vmatpush1.bf16.msra.mxu0 0
    %263 = vmatprep.subr.bf16.mxu0 0
    %264 = vmatpush1.bf16.msra.mxu0 0
    %265 = vmatprep.subr.bf16.mxu0 0
    %266 = vmatpush1.bf16.msra.mxu0 0
    %267 = vmatprep.subr.bf16.mxu0 0
    %268 = vmatpush1.bf16.msra.mxu0 0
    %269 = vmatprep.subr.bf16.mxu0 0
    %270 = vmatpush1.bf16.msra.mxu0 0
    %271 = vmatprep.subr.bf16.mxu0 0
    %272 = vmatpush1.bf16.msra.mxu0 0
    %273 = vmatprep.subr.bf16.mxu0 0
    %274 = vmatpush1.bf16.msra.mxu0 0
    %275 = vmatprep.subr.bf16.mxu0 0
    %276 = vmatpush1.bf16.msra.mxu0 0
    %277 = vmatprep.subr.bf16.mxu0 0
    %278 = vmatpush1.bf16.msra.mxu0 0
    %279 = vmatprep.subr.bf16.mxu0 0
    %280 = vmatpush1.bf16.msra.mxu0 0
    %281 = vmatprep.subr.bf16.mxu0 0
    %282 = vmatpush1.bf16.msra.mxu0 0
    %283 = vmatprep.subr.bf16.mxu0 0
    %284 = vmatpush1.bf16.msra.mxu0 0
    %285 = vmatprep.subr.bf16.mxu0 0
    %286 = vmatpush1.bf16.msra.mxu0 0
    %287 = vmatprep.mubr.bf16.mxu0 0
    %288 = vmatmul.mubr.bf16.gmra.mrb[0].mxu0 %v212
    %v289 = vpop.f32.mrb[0].mxu0
    %v290 = vadd.f32 %v181, %v289
    %v291 = vpop.f32.mrb[0].mxu0
    %v292 = vadd.f32 %v185, %v291
    %v293 = vpop.f32.mrb[0].mxu0
    %v294 = vpop.f32.mrb[0].mxu0
    %295 = vdwg.mxu0
    %v296 = vtanh.pop %v249
    %v297 = vtanh.pop %v251
    %v298 = vtanh.pop %v290
    %v299 = vtanh.pop %v292
    %v300 = vpack.c.bf16 %v296, %v296
    %v301 = vpack.c.bf16 %v297, %v297
    %v302 = vpack.c.bf16 %v298, %v298
    %v303 = vpack.c.bf16 %v299, %v299
    %v304 = vld [vmem:[#allocation8] sm:$0xff]
    %v305 = vld [vmem:[#allocation8 + $0x8] sm:$0xff]
    %v306 = vld [vmem:[#allocation8 + $0x10] sm:$0xff]
    %v307 = vld [vmem:[#allocation8 + $0x18] sm:$0xff]
    %v308 = vld [vmem:[#allocation8 + $0x20] sm:$0xff]
    %v309 = vld [vmem:[#allocation8 + $0x28] sm:$0xff]
    %v310 = vld [vmem:[#allocation8 + $0x30] sm:$0xff]
    %v311 = vld [vmem:[#allocation8 + $0x38] sm:$0xff]
    %v312 = vld [vmem:[#allocation8 + $0x40] sm:$0xff]
    %v313 = vld [vmem:[#allocation8 + $0x48] sm:$0xff]
    %v314 = vld [vmem:[#allocation8 + $0x50] sm:$0xff]
    %v315 = vld [vmem:[#allocation8 + $0x58] sm:$0xff]
    %v316 = vld [vmem:[#allocation8 + $0x60] sm:$0xff]
    %v317 = vld [vmem:[#allocation8 + $0x68] sm:$0xff]
    %v318 = vld [vmem:[#allocation8 + $0x70] sm:$0xff]
    %v319 = vld [vmem:[#allocation8 + $0x78] sm:$0xff]
    %v320 = vld [vmem:[#allocation8 + $0x80] sm:$0xff]
    %v321 = vld [vmem:[#allocation8 + $0x88] sm:$0xff]
    %v322 = vld [vmem:[#allocation8 + $0x90] sm:$0xff]
    %v323 = vld [vmem:[#allocation8 + $0x98] sm:$0xff]
    %v324 = vld [vmem:[#allocation8 + $0xa0] sm:$0xff]
    %v325 = vld [vmem:[#allocation8 + $0xa8] sm:$0xff]
    %v326 = vld [vmem:[#allocation8 + $0xb0] sm:$0xff]
    %v327 = vld [vmem:[#allocation8 + $0xb8] sm:$0xff]
    %v328 = vld [vmem:[#allocation8 + $0xc0] sm:$0xff]
    %v329 = vld [vmem:[#allocation8 + $0xc8] sm:$0xff]
    %v330 = vld [vmem:[#allocation8 + $0xd0] sm:$0xff]
    %v331 = vld [vmem:[#allocation8 + $0xd8] sm:$0xff]
    %v332 = vld [vmem:[#allocation8 + $0xe0] sm:$0xff]
    %v333 = vld [vmem:[#allocation8 + $0xe8] sm:$0xff]
    %v334 = vld [vmem:[#allocation8 + $0xf0] sm:$0xff]
    %v335 = vld [vmem:[#allocation8 + $0xf8] sm:$0xff]
    %v336 = vld [vmem:[#allocation10] sm:$0x3]
    %v338 = vlaneseq
    %v339 = vshrl.u32 %v338, 7
    %v340 = vsub.s32 0, %v339
    %v341 = vrot.slane %v336, %v340
    %v342 = vlaneseq
    %v343 = vshrl.u32 %v342, 7
    %v344 = vsub.s32 1, %v343
    %v345 = vrot.slane %v336, %v344
    %v380 = vunpack.c.l.b16 %v304
    %v381 = vunpack.c.h.b16 %v304
    %v382 = vunpack.c.l.b16 %v305
    %v383 = vunpack.c.h.b16 %v305
    %v384 = vunpack.c.l.b16 %v306
    %v385 = vunpack.c.h.b16 %v306
    %v386 = vunpack.c.l.b16 %v307
    %v387 = vunpack.c.h.b16 %v307
    %v388 = vunpack.c.l.b16 %v308
    %v389 = vunpack.c.h.b16 %v308
    %v390 = vunpack.c.l.b16 %v309
    %v391 = vunpack.c.h.b16 %v309
    %v392 = vunpack.c.l.b16 %v310
    %v393 = vunpack.c.h.b16 %v310
    %v394 = vunpack.c.l.b16 %v311
    %v395 = vunpack.c.h.b16 %v311
    %v396 = vunpack.c.l.b16 %v312
    %v397 = vunpack.c.h.b16 %v312
    %v398 = vunpack.c.l.b16 %v313
    %v399 = vunpack.c.h.b16 %v313
    %v400 = vunpack.c.l.b16 %v314
    %v401 = vunpack.c.h.b16 %v314
    %v402 = vunpack.c.l.b16 %v315
    %v403 = vunpack.c.h.b16 %v315
    %v404 = vunpack.c.l.b16 %v316
    %v405 = vunpack.c.h.b16 %v316
    %v406 = vunpack.c.l.b16 %v317
    %v407 = vunpack.c.h.b16 %v317
    %v408 = vunpack.c.l.b16 %v318
    %v409 = vunpack.c.h.b16 %v318
    %v410 = vunpack.c.l.b16 %v319
    %v411 = vunpack.c.h.b16 %v319
    %v412 = vunpack.c.l.b16 %v320
    %v413 = vunpack.c.h.b16 %v320
    %v414 = vunpack.c.l.b16 %v321
    %v415 = vunpack.c.h.b16 %v321
    %v416 = vunpack.c.l.b16 %v322
    %v417 = vunpack.c.h.b16 %v322
    %v418 = vunpack.c.l.b16 %v323
    %v419 = vunpack.c.h.b16 %v323
    %v420 = vunpack.c.l.b16 %v324
    %v421 = vunpack.c.h.b16 %v324
    %v422 = vunpack.c.l.b16 %v325
    %v423 = vunpack.c.h.b16 %v325
    %v424 = vunpack.c.l.b16 %v326
    %v425 = vunpack.c.h.b16 %v326
    %v426 = vunpack.c.l.b16 %v327
    %v427 = vunpack.c.h.b16 %v327
    %v428 = vunpack.c.l.b16 %v328
    %v429 = vunpack.c.h.b16 %v328
    %v430 = vunpack.c.l.b16 %v329
    %v431 = vunpack.c.h.b16 %v329
    %v432 = vunpack.c.l.b16 %v330
    %v433 = vunpack.c.h.b16 %v330
    %v434 = vunpack.c.l.b16 %v331
    %v435 = vunpack.c.h.b16 %v331
    %v436 = vunpack.c.l.b16 %v332
    %v437 = vunpack.c.h.b16 %v332
    %v438 = vunpack.c.l.b16 %v333
    %v439 = vunpack.c.h.b16 %v333
    %v440 = vunpack.c.l.b16 %v334
    %v441 = vunpack.c.h.b16 %v334
    %v442 = vunpack.c.l.b16 %v335
    %v443 = vunpack.c.h.b16 %v335
    %v444 = vpack.c.b16 %v382, %v380
    %v445 = vpack.c.b16 %v383, %v381
    %v446 = vpack.c.b16 %v386, %v384
    %v447 = vpack.c.b16 %v387, %v385
    %v448 = vpack.c.b16 %v390, %v388
    %v449 = vpack.c.b16 %v391, %v389
    %v450 = vpack.c.b16 %v394, %v392
    %v451 = vpack.c.b16 %v395, %v393
    %v452 = vpack.c.b16 %v398, %v396
    %v453 = vpack.c.b16 %v399, %v397
    %v454 = vpack.c.b16 %v402, %v400
    %v455 = vpack.c.b16 %v403, %v401
    %v456 = vpack.c.b16 %v406, %v404
    %v457 = vpack.c.b16 %v407, %v405
    %v458 = vpack.c.b16 %v410, %v408
    %v459 = vpack.c.b16 %v411, %v409
    %v460 = vpack.c.b16 %v414, %v412
    %v461 = vpack.c.b16 %v415, %v413
    %v462 = vpack.c.b16 %v418, %v416
    %v463 = vpack.c.b16 %v419, %v417
    %v464 = vpack.c.b16 %v422, %v420
    %v465 = vpack.c.b16 %v423, %v421
    %v466 = vpack.c.b16 %v426, %v424
    %v467 = vpack.c.b16 %v427, %v425
    %v468 = vpack.c.b16 %v430, %v428
    %v469 = vpack.c.b16 %v431, %v429
    %v470 = vpack.c.b16 %v434, %v432
    %v471 = vpack.c.b16 %v435, %v433
    %v472 = vpack.c.b16 %v438, %v436
    %v473 = vpack.c.b16 %v439, %v437
    %v474 = vpack.c.b16 %v442, %v440
    %v475 = vpack.c.b16 %v443, %v441
    %508 = vmatprep.subr.bf16.mxu0 %v445
    %509 = vmatpush1.bf16.msra.mxu0 %v444
    %510 = vmatprep.subr.bf16.mxu0 %v447
    %511 = vmatpush1.bf16.msra.mxu0 %v446
    %512 = vmatprep.subr.bf16.mxu0 %v449
    %513 = vmatpush1.bf16.msra.mxu0 %v448
    %514 = vmatprep.subr.bf16.mxu0 %v451
    %515 = vmatpush1.bf16.msra.mxu0 %v450
    %516 = vmatprep.subr.bf16.mxu0 %v453
    %517 = vmatpush1.bf16.msra.mxu0 %v452
    %518 = vmatprep.subr.bf16.mxu0 %v455
    %519 = vmatpush1.bf16.msra.mxu0 %v454
    %520 = vmatprep.subr.bf16.mxu0 %v457
    %521 = vmatpush1.bf16.msra.mxu0 %v456
    %522 = vmatprep.subr.bf16.mxu0 %v459
    %523 = vmatpush1.bf16.msra.mxu0 %v458
    %524 = vmatprep.subr.bf16.mxu0 %v461
    %525 = vmatpush1.bf16.msra.mxu0 %v460
    %526 = vmatprep.subr.bf16.mxu0 %v463
    %527 = vmatpush1.bf16.msra.mxu0 %v462
    %528 = vmatprep.subr.bf16.mxu0 %v465
    %529 = vmatpush1.bf16.msra.mxu0 %v464
    %530 = vmatprep.subr.bf16.mxu0 %v467
    %531 = vmatpush1.bf16.msra.mxu0 %v466
    %532 = vmatprep.subr.bf16.mxu0 %v469
    %533 = vmatpush1.bf16.msra.mxu0 %v468
    %534 = vmatprep.subr.bf16.mxu0 %v471
    %535 = vmatpush1.bf16.msra.mxu0 %v470
    %536 = vmatprep.subr.bf16.mxu0 %v473
    %537 = vmatpush1.bf16.msra.mxu0 %v472
    %538 = vmatprep.subr.bf16.mxu0 %v475
    %539 = vmatpush1.bf16.msra.mxu0 %v474
    %540 = vmatprep.mubr.bf16.mxu0 %v301
    %541 = vmatmul.mubr.bf16.gmra.mrb[0].mxu0 %v300
    %v542 = vpop.f32.mrb[0].mxu0
    %v543 = vadd.f32 %v341, %v542
    %v544 = vpop.f32.mrb[0].mxu0
    %v545 = vadd.f32 %v345, %v544
    %v546 = vpop.f32.mrb[0].mxu0
    %v547 = vpop.f32.mrb[0].mxu0
    %548 = vdwg.mxu0
    %v549 = vtanh.pop %v543
    %v550 = vtanh.pop %v545
    %v551 = vpack.c.bf16 %v549, %v549
    %v552 = vpack.c.bf16 %v550, %v550
    %v553 = vld [vmem:[#allocation11] sm:$0xff]
    %v554 = vld [vmem:[#allocation11 + $0x8] sm:$0xff]
    %v555 = vld [vmem:[#allocation11 + $0x10] sm:$0xff]
    %v556 = vld [vmem:[#allocation11 + $0x18] sm:$0xff]
    %v557 = vld [vmem:[#allocation11 + $0x20] sm:$0xff]
    %v558 = vld [vmem:[#allocation11 + $0x28] sm:$0xff]
    %v559 = vld [vmem:[#allocation11 + $0x30] sm:$0xff]
    %v560 = vld [vmem:[#allocation11 + $0x38] sm:$0xff]
    %v561 = vld [vmem:[#allocation11 + $0x40] sm:$0xff]
    %v562 = vld [vmem:[#allocation11 + $0x48] sm:$0xff]
    %v563 = vld [vmem:[#allocation11 + $0x50] sm:$0xff]
    %v564 = vld [vmem:[#allocation11 + $0x58] sm:$0xff]
    %v565 = vld [vmem:[#allocation11 + $0x60] sm:$0xff]
    %v566 = vld [vmem:[#allocation11 + $0x68] sm:$0xff]
    %v567 = vld [vmem:[#allocation11 + $0x70] sm:$0xff]
    %v568 = vld [vmem:[#allocation11 + $0x78] sm:$0xff]
    %v569 = vld [vmem:[#allocation11 + $0x80] sm:$0xff]
    %v570 = vld [vmem:[#allocation11 + $0x88] sm:$0xff]
    %v571 = vld [vmem:[#allocation11 + $0x90] sm:$0xff]
    %v572 = vld [vmem:[#allocation11 + $0x98] sm:$0xff]
    %v573 = vld [vmem:[#allocation11 + $0xa0] sm:$0xff]
    %v574 = vld [vmem:[#allocation11 + $0xa8] sm:$0xff]
    %v575 = vld [vmem:[#allocation11 + $0xb0] sm:$0xff]
    %v576 = vld [vmem:[#allocation11 + $0xb8] sm:$0xff]
    %v577 = vld [vmem:[#allocation11 + $0xc0] sm:$0xff]
    %v578 = vld [vmem:[#allocation11 + $0xc8] sm:$0xff]
    %v579 = vld [vmem:[#allocation11 + $0xd0] sm:$0xff]
    %v580 = vld [vmem:[#allocation11 + $0xd8] sm:$0xff]
    %v581 = vld [vmem:[#allocation11 + $0xe0] sm:$0xff]
    %v582 = vld [vmem:[#allocation11 + $0xe8] sm:$0xff]
    %v583 = vld [vmem:[#allocation11 + $0xf0] sm:$0xff]
    %v584 = vld [vmem:[#allocation11 + $0xf8] sm:$0xff]
    %v585 = vld [vmem:[#allocation13] sm:$0x3]
    %v587 = vlaneseq
    %v588 = vshrl.u32 %v587, 7
    %v589 = vsub.s32 0, %v588
    %v590 = vrot.slane %v585, %v589
    %v591 = vlaneseq
    %v592 = vshrl.u32 %v591, 7
    %v593 = vsub.s32 1, %v592
    %v594 = vrot.slane %v585, %v593
    %v629 = vunpack.c.l.b16 %v553
    %v630 = vunpack.c.h.b16 %v553
    %v631 = vunpack.c.l.b16 %v554
    %v632 = vunpack.c.h.b16 %v554
    %v633 = vunpack.c.l.b16 %v555
    %v634 = vunpack.c.h.b16 %v555
    %v635 = vunpack.c.l.b16 %v556
    %v636 = vunpack.c.h.b16 %v556
    %v637 = vunpack.c.l.b16 %v557
    %v638 = vunpack.c.h.b16 %v557
    %v639 = vunpack.c.l.b16 %v558
    %v640 = vunpack.c.h.b16 %v558
    %v641 = vunpack.c.l.b16 %v559
    %v642 = vunpack.c.h.b16 %v559
    %v643 = vunpack.c.l.b16 %v560
    %v644 = vunpack.c.h.b16 %v560
    %v645 = vunpack.c.l.b16 %v561
    %v646 = vunpack.c.h.b16 %v561
    %v647 = vunpack.c.l.b16 %v562
    %v648 = vunpack.c.h.b16 %v562
    %v649 = vunpack.c.l.b16 %v563
    %v650 = vunpack.c.h.b16 %v563
    %v651 = vunpack.c.l.b16 %v564
    %v652 = vunpack.c.h.b16 %v564
    %v653 = vunpack.c.l.b16 %v565
    %v654 = vunpack.c.h.b16 %v565
    %v655 = vunpack.c.l.b16 %v566
    %v656 = vunpack.c.h.b16 %v566
    %v657 = vunpack.c.l.b16 %v567
    %v658 = vunpack.c.h.b16 %v567
    %v659 = vunpack.c.l.b16 %v568
    %v660 = vunpack.c.h.b16 %v568
    %v661 = vunpack.c.l.b16 %v569
    %v662 = vunpack.c.h.b16 %v569
    %v663 = vunpack.c.l.b16 %v570
    %v664 = vunpack.c.h.b16 %v570
    %v665 = vunpack.c.l.b16 %v571
    %v666 = vunpack.c.h.b16 %v571
    %v667 = vunpack.c.l.b16 %v572
    %v668 = vunpack.c.h.b16 %v572
    %v669 = vunpack.c.l.b16 %v573
    %v670 = vunpack.c.h.b16 %v573
    %v671 = vunpack.c.l.b16 %v574
    %v672 = vunpack.c.h.b16 %v574
    %v673 = vunpack.c.l.b16 %v575
    %v674 = vunpack.c.h.b16 %v575
    %v675 = vunpack.c.l.b16 %v576
    %v676 = vunpack.c.h.b16 %v576
    %v677 = vunpack.c.l.b16 %v577
    %v678 = vunpack.c.h.b16 %v577
    %v679 = vunpack.c.l.b16 %v578
    %v680 = vunpack.c.h.b16 %v578
    %v681 = vunpack.c.l.b16 %v579
    %v682 = vunpack.c.h.b16 %v579
    %v683 = vunpack.c.l.b16 %v580
    %v684 = vunpack.c.h.b16 %v580
    %v685 = vunpack.c.l.b16 %v581
    %v686 = vunpack.c.h.b16 %v581
    %v687 = vunpack.c.l.b16 %v582
    %v688 = vunpack.c.h.b16 %v582
    %v689 = vunpack.c.l.b16 %v583
    %v690 = vunpack.c.h.b16 %v583
    %v691 = vunpack.c.l.b16 %v584
    %v692 = vunpack.c.h.b16 %v584
    %v693 = vpack.c.b16 %v631, %v629
    %v694 = vpack.c.b16 %v632, %v630
    %v695 = vpack.c.b16 %v635, %v633
    %v696 = vpack.c.b16 %v636, %v634
    %v697 = vpack.c.b16 %v639, %v637
    %v698 = vpack.c.b16 %v640, %v638
    %v699 = vpack.c.b16 %v643, %v641
    %v700 = vpack.c.b16 %v644, %v642
    %v701 = vpack.c.b16 %v647, %v645
    %v702 = vpack.c.b16 %v648, %v646
    %v703 = vpack.c.b16 %v651, %v649
    %v704 = vpack.c.b16 %v652, %v650
    %v705 = vpack.c.b16 %v655, %v653
    %v706 = vpack.c.b16 %v656, %v654
    %v707 = vpack.c.b16 %v659, %v657
    %v708 = vpack.c.b16 %v660, %v658
    %v709 = vpack.c.b16 %v663, %v661
    %v710 = vpack.c.b16 %v664, %v662
    %v711 = vpack.c.b16 %v667, %v665
    %v712 = vpack.c.b16 %v668, %v666
    %v713 = vpack.c.b16 %v671, %v669
    %v714 = vpack.c.b16 %v672, %v670
    %v715 = vpack.c.b16 %v675, %v673
    %v716 = vpack.c.b16 %v676, %v674
    %v717 = vpack.c.b16 %v679, %v677
    %v718 = vpack.c.b16 %v680, %v678
    %v719 = vpack.c.b16 %v683, %v681
    %v720 = vpack.c.b16 %v684, %v682
    %v721 = vpack.c.b16 %v687, %v685
    %v722 = vpack.c.b16 %v688, %v686
    %v723 = vpack.c.b16 %v691, %v689
    %v724 = vpack.c.b16 %v692, %v690
    %757 = vmatprep.subr.bf16.mxu0 %v694
    %758 = vmatpush1.bf16.msra.mxu0 %v693
    %759 = vmatprep.subr.bf16.mxu0 %v696
    %760 = vmatpush1.bf16.msra.mxu0 %v695
    %761 = vmatprep.subr.bf16.mxu0 %v698
    %762 = vmatpush1.bf16.msra.mxu0 %v697
    %763 = vmatprep.subr.bf16.mxu0 %v700
    %764 = vmatpush1.bf16.msra.mxu0 %v699
    %765 = vmatprep.subr.bf16.mxu0 %v702
    %766 = vmatpush1.bf16.msra.mxu0 %v701
    %767 = vmatprep.subr.bf16.mxu0 %v704
    %768 = vmatpush1.bf16.msra.mxu0 %v703
    %769 = vmatprep.subr.bf16.mxu0 %v706
    %770 = vmatpush1.bf16.msra.mxu0 %v705
    %771 = vmatprep.subr.bf16.mxu0 %v708
    %772 = vmatpush1.bf16.msra.mxu0 %v707
    %773 = vmatprep.subr.bf16.mxu0 %v710
    %774 = vmatpush1.bf16.msra.mxu0 %v709
    %775 = vmatprep.subr.bf16.mxu0 %v712
    %776 = vmatpush1.bf16.msra.mxu0 %v711
    %777 = vmatprep.subr.bf16.mxu0 %v714
    %778 = vmatpush1.bf16.msra.mxu0 %v713
    %779 = vmatprep.subr.bf16.mxu0 %v716
    %780 = vmatpush1.bf16.msra.mxu0 %v715
    %781 = vmatprep.subr.bf16.mxu0 %v718
    %782 = vmatpush1.bf16.msra.mxu0 %v717
    %783 = vmatprep.subr.bf16.mxu0 %v720
    %784 = vmatpush1.bf16.msra.mxu0 %v719
    %785 = vmatprep.subr.bf16.mxu0 %v722
    %786 = vmatpush1.bf16.msra.mxu0 %v721
    %787 = vmatprep.subr.bf16.mxu0 %v724
    %788 = vmatpush1.bf16.msra.mxu0 %v723
    %789 = vmatprep.mubr.bf16.mxu0 %v303
    %790 = vmatmul.mubr.bf16.gmra.mrb[0].mxu0 %v302
    %v791 = vpop.f32.mrb[0].mxu0
    %v792 = vadd.f32 %v590, %v791
    %v793 = vpop.f32.mrb[0].mxu0
    %v794 = vadd.f32 %v594, %v793
    %v795 = vpop.f32.mrb[0].mxu0
    %v796 = vpop.f32.mrb[0].mxu0
    %797 = vdwg.mxu0
    %v798 = vtanh.pop %v792
    %v799 = vtanh.pop %v794
    %v800 = vpack.c.bf16 %v798, %v798
    %v801 = vpack.c.bf16 %v799, %v799
    %v802 = vld [vmem:[#allocation14] sm:$0xf]
    %v803 = vld [vmem:[#allocation14 + $0x4] sm:$0xf]
    %v804 = vld [vmem:[#allocation14 + $0x8] sm:$0xf]
    %v805 = vld [vmem:[#allocation14 + $0xc] sm:$0xf]
    %v806 = vld [vmem:[#allocation14 + $0x10] sm:$0xf]
    %v807 = vld [vmem:[#allocation14 + $0x14] sm:$0xf]
    %v808 = vld [vmem:[#allocation14 + $0x18] sm:$0xf]
    %v809 = vld [vmem:[#allocation14 + $0x1c] sm:$0xf]
    %v810 = vld [vmem:[#allocation14 + $0x20] sm:$0xf]
    %v811 = vld [vmem:[#allocation14 + $0x24] sm:$0xf]
    %v812 = vld [vmem:[#allocation14 + $0x28] sm:$0xf]
    %v813 = vld [vmem:[#allocation14 + $0x2c] sm:$0xf]
    %v814 = vld [vmem:[#allocation14 + $0x30] sm:$0xf]
    %v815 = vld [vmem:[#allocation14 + $0x34] sm:$0xf]
    %v816 = vld [vmem:[#allocation14 + $0x38] sm:$0xf]
    %v817 = vld [vmem:[#allocation14 + $0x3c] sm:$0xf]
    %v818 = vld [vmem:[#allocation14 + $0x40] sm:$0xf]
    %v819 = vld [vmem:[#allocation14 + $0x44] sm:$0xf]
    %v820 = vld [vmem:[#allocation14 + $0x48] sm:$0xf]
    %v821 = vld [vmem:[#allocation14 + $0x4c] sm:$0xf]
    %v822 = vld [vmem:[#allocation14 + $0x50] sm:$0xf]
    %v823 = vld [vmem:[#allocation14 + $0x54] sm:$0xf]
    %v824 = vld [vmem:[#allocation14 + $0x58] sm:$0xf]
    %v825 = vld [vmem:[#allocation14 + $0x5c] sm:$0xf]
    %v826 = vld [vmem:[#allocation14 + $0x60] sm:$0xf]
    %v827 = vld [vmem:[#allocation14 + $0x64] sm:$0xf]
    %v828 = vld [vmem:[#allocation14 + $0x68] sm:$0xf]
    %v829 = vld [vmem:[#allocation14 + $0x6c] sm:$0xf]
    %v830 = vld [vmem:[#allocation14 + $0x70] sm:$0xf]
    %v831 = vld [vmem:[#allocation14 + $0x74] sm:$0xf]
    %v832 = vld [vmem:[#allocation14 + $0x78] sm:$0xf]
    %v833 = vld [vmem:[#allocation14 + $0x7c] sm:$0xf]
    %v834 = vld [vmem:[#allocation16] sm:$0xf]
    %v835 = vld [vmem:[#allocation16 + $0x4] sm:$0xf]
    %v836 = vld [vmem:[#allocation16 + $0x8] sm:$0xf]
    %v837 = vld [vmem:[#allocation16 + $0xc] sm:$0xf]
    %v838 = vld [vmem:[#allocation16 + $0x10] sm:$0xf]
    %v839 = vld [vmem:[#allocation16 + $0x14] sm:$0xf]
    %v840 = vld [vmem:[#allocation16 + $0x18] sm:$0xf]
    %v841 = vld [vmem:[#allocation16 + $0x1c] sm:$0xf]
    %v842 = vld [vmem:[#allocation16 + $0x20] sm:$0xf]
    %v843 = vld [vmem:[#allocation16 + $0x24] sm:$0xf]
    %v844 = vld [vmem:[#allocation16 + $0x28] sm:$0xf]
    %v845 = vld [vmem:[#allocation16 + $0x2c] sm:$0xf]
    %v846 = vld [vmem:[#allocation16 + $0x30] sm:$0xf]
    %v847 = vld [vmem:[#allocation16 + $0x34] sm:$0xf]
    %v848 = vld [vmem:[#allocation16 + $0x38] sm:$0xf]
    %v849 = vld [vmem:[#allocation16 + $0x3c] sm:$0xf]
    %v850 = vld [vmem:[#allocation16 + $0x40] sm:$0xf]
    %v851 = vld [vmem:[#allocation16 + $0x44] sm:$0xf]
    %v852 = vld [vmem:[#allocation16 + $0x48] sm:$0xf]
    %v853 = vld [vmem:[#allocation16 + $0x4c] sm:$0xf]
    %v854 = vld [vmem:[#allocation16 + $0x50] sm:$0xf]
    %v855 = vld [vmem:[#allocation16 + $0x54] sm:$0xf]
    %v856 = vld [vmem:[#allocation16 + $0x58] sm:$0xf]
    %v857 = vld [vmem:[#allocation16 + $0x5c] sm:$0xf]
    %v858 = vld [vmem:[#allocation16 + $0x60] sm:$0xf]
    %v859 = vld [vmem:[#allocation16 + $0x64] sm:$0xf]
    %v860 = vld [vmem:[#allocation16 + $0x68] sm:$0xf]
    %v861 = vld [vmem:[#allocation16 + $0x6c] sm:$0xf]
    %v862 = vld [vmem:[#allocation16 + $0x70] sm:$0xf]
    %v863 = vld [vmem:[#allocation16 + $0x74] sm:$0xf]
    %v864 = vld [vmem:[#allocation16 + $0x78] sm:$0xf]
    %v865 = vld [vmem:[#allocation16 + $0x7c] sm:$0xf]
    %v898 = vunpack.c.l.b16 %v834
    %v899 = vunpack.c.l.b16 %v835
    %v900 = vunpack.c.l.b16 %v836
    %v901 = vunpack.c.l.b16 %v837
    %v902 = vunpack.c.l.b16 %v838
    %v903 = vunpack.c.l.b16 %v839
    %v904 = vunpack.c.l.b16 %v840
    %v905 = vunpack.c.l.b16 %v841
    %v906 = vunpack.c.l.b16 %v842
    %v907 = vunpack.c.l.b16 %v843
    %v908 = vunpack.c.l.b16 %v844
    %v909 = vunpack.c.l.b16 %v845
    %v910 = vunpack.c.l.b16 %v846
    %v911 = vunpack.c.l.b16 %v847
    %v912 = vunpack.c.l.b16 %v848
    %v913 = vunpack.c.l.b16 %v849
    %v914 = vunpack.c.l.b16 %v850
    %v915 = vunpack.c.l.b16 %v851
    %v916 = vunpack.c.l.b16 %v852
    %v917 = vunpack.c.l.b16 %v853
    %v918 = vunpack.c.l.b16 %v854
    %v919 = vunpack.c.l.b16 %v855
    %v920 = vunpack.c.l.b16 %v856
    %v921 = vunpack.c.l.b16 %v857
    %v922 = vunpack.c.l.b16 %v858
    %v923 = vunpack.c.l.b16 %v859
    %v924 = vunpack.c.l.b16 %v860
    %v925 = vunpack.c.l.b16 %v861
    %v926 = vunpack.c.l.b16 %v862
    %v927 = vunpack.c.l.b16 %v863
    %v928 = vunpack.c.l.b16 %v864
    %v929 = vunpack.c.l.b16 %v865
    %v930 = vpack.c.b16 %v899, %v898
    %v931 = vpack.c.b16 %v901, %v900
    %v932 = vpack.c.b16 %v903, %v902
    %v933 = vpack.c.b16 %v905, %v904
    %v934 = vpack.c.b16 %v907, %v906
    %v935 = vpack.c.b16 %v909, %v908
    %v936 = vpack.c.b16 %v911, %v910
    %v937 = vpack.c.b16 %v913, %v912
    %v938 = vpack.c.b16 %v915, %v914
    %v939 = vpack.c.b16 %v917, %v916
    %v940 = vpack.c.b16 %v919, %v918
    %v941 = vpack.c.b16 %v921, %v920
    %v942 = vpack.c.b16 %v923, %v922
    %v943 = vpack.c.b16 %v925, %v924
    %v944 = vpack.c.b16 %v927, %v926
    %v945 = vpack.c.b16 %v929, %v928
    %962 = vmatprep.subr.bf16.mxu0 0
    %963 = vmatpush1.bf16.msra.mxu0 %v930
    %964 = vmatprep.subr.bf16.mxu0 0
    %965 = vmatpush1.bf16.msra.mxu0 %v931
    %966 = vmatprep.subr.bf16.mxu0 0
    %967 = vmatpush1.bf16.msra.mxu0 %v932
    %968 = vmatprep.subr.bf16.mxu0 0
    %969 = vmatpush1.bf16.msra.mxu0 %v933
    %970 = vmatprep.subr.bf16.mxu0 0
    %971 = vmatpush1.bf16.msra.mxu0 %v934
    %972 = vmatprep.subr.bf16.mxu0 0
    %973 = vmatpush1.bf16.msra.mxu0 %v935
    %974 = vmatprep.subr.bf16.mxu0 0
    %975 = vmatpush1.bf16.msra.mxu0 %v936
    %976 = vmatprep.subr.bf16.mxu0 0
    %977 = vmatpush1.bf16.msra.mxu0 %v937
    %978 = vmatprep.subr.bf16.mxu0 0
    %979 = vmatpush1.bf16.msra.mxu0 %v938
    %980 = vmatprep.subr.bf16.mxu0 0
    %981 = vmatpush1.bf16.msra.mxu0 %v939
    %982 = vmatprep.subr.bf16.mxu0 0
    %983 = vmatpush1.bf16.msra.mxu0 %v940
    %984 = vmatprep.subr.bf16.mxu0 0
    %985 = vmatpush1.bf16.msra.mxu0 %v941
    %986 = vmatprep.subr.bf16.mxu0 0
    %987 = vmatpush1.bf16.msra.mxu0 %v942
    %988 = vmatprep.subr.bf16.mxu0 0
    %989 = vmatpush1.bf16.msra.mxu0 %v943
    %990 = vmatprep.subr.bf16.mxu0 0
    %991 = vmatpush1.bf16.msra.mxu0 %v944
    %992 = vmatprep.subr.bf16.mxu0 0
    %993 = vmatpush1.bf16.msra.mxu0 %v945
    %994 = vmatprep.mubr.bf16.mxu0 %v801
    %995 = vmatmul.mubr.bf16.gmra.mrb[0].mxu0 %v800
    %v996 = vpop.f32.mrb[0].mxu0
    %v997 = vadd.f32 0.0, %v996
    %v998 = vpop.f32.mrb[0].mxu0
    %v999 = vpop.f32.mrb[0].mxu0
    %v1000 = vpop.f32.mrb[0].mxu0
    %1001 = vdwg.mxu0
    %v1034 = vunpack.c.l.b16 %v802
    %v1035 = vunpack.c.l.b16 %v803
    %v1036 = vunpack.c.l.b16 %v804
    %v1037 = vunpack.c.l.b16 %v805
    %v1038 = vunpack.c.l.b16 %v806
    %v1039 = vunpack.c.l.b16 %v807
    %v1040 = vunpack.c.l.b16 %v808
    %v1041 = vunpack.c.l.b16 %v809
    %v1042 = vunpack.c.l.b16 %v810
    %v1043 = vunpack.c.l.b16 %v811
    %v1044 = vunpack.c.l.b16 %v812
    %v1045 = vunpack.c.l.b16 %v813
    %v1046 = vunpack.c.l.b16 %v814
    %v1047 = vunpack.c.l.b16 %v815
    %v1048 = vunpack.c.l.b16 %v816
    %v1049 = vunpack.c.l.b16 %v817
    %v1050 = vunpack.c.l.b16 %v818
    %v1051 = vunpack.c.l.b16 %v819
    %v1052 = vunpack.c.l.b16 %v820
    %v1053 = vunpack.c.l.b16 %v821
    %v1054 = vunpack.c.l.b16 %v822
    %v1055 = vunpack.c.l.b16 %v823
    %v1056 = vunpack.c.l.b16 %v824
    %v1057 = vunpack.c.l.b16 %v825
    %v1058 = vunpack.c.l.b16 %v826
    %v1059 = vunpack.c.l.b16 %v827
    %v1060 = vunpack.c.l.b16 %v828
    %v1061 = vunpack.c.l.b16 %v829
    %v1062 = vunpack.c.l.b16 %v830
    %v1063 = vunpack.c.l.b16 %v831
    %v1064 = vunpack.c.l.b16 %v832
    %v1065 = vunpack.c.l.b16 %v833
    %v1066 = vpack.c.b16 %v1035, %v1034
    %v1067 = vpack.c.b16 %v1037, %v1036
    %v1068 = vpack.c.b16 %v1039, %v1038
    %v1069 = vpack.c.b16 %v1041, %v1040
    %v1070 = vpack.c.b16 %v1043, %v1042
    %v1071 = vpack.c.b16 %v1045, %v1044
    %v1072 = vpack.c.b16 %v1047, %v1046
    %v1073 = vpack.c.b16 %v1049, %v1048
    %v1074 = vpack.c.b16 %v1051, %v1050
    %v1075 = vpack.c.b16 %v1053, %v1052
    %v1076 = vpack.c.b16 %v1055, %v1054
    %v1077 = vpack.c.b16 %v1057, %v1056
    %v1078 = vpack.c.b16 %v1059, %v1058
    %v1079 = vpack.c.b16 %v1061, %v1060
    %v1080 = vpack.c.b16 %v1063, %v1062
    %v1081 = vpack.c.b16 %v1065, %v1064
    %1098 = vmatprep.subr.bf16.mxu0 0
    %1099 = vmatpush1.bf16.msra.mxu0 %v1066
    %1100 = vmatprep.subr.bf16.mxu0 0
    %1101 = vmatpush1.bf16.msra.mxu0 %v1067
    %1102 = vmatprep.subr.bf16.mxu0 0
    %1103 = vmatpush1.bf16.msra.mxu0 %v1068
    %1104 = vmatprep.subr.bf16.mxu0 0
    %1105 = vmatpush1.bf16.msra.mxu0 %v1069
    %1106 = vmatprep.subr.bf16.mxu0 0
    %1107 = vmatpush1.bf16.msra.mxu0 %v1070
    %1108 = vmatprep.subr.bf16.mxu0 0
    %1109 = vmatpush1.bf16.msra.mxu0 %v1071
    %1110 = vmatprep.subr.bf16.mxu0 0
    %1111 = vmatpush1.bf16.msra.mxu0 %v1072
    %1112 = vmatprep.subr.bf16.mxu0 0
    %1113 = vmatpush1.bf16.msra.mxu0 %v1073
    %1114 = vmatprep.subr.bf16.mxu0 0
    %1115 = vmatpush1.bf16.msra.mxu0 %v1074
    %1116 = vmatprep.subr.bf16.mxu0 0
    %1117 = vmatpush1.bf16.msra.mxu0 %v1075
    %1118 = vmatprep.subr.bf16.mxu0 0
    %1119 = vmatpush1.bf16.msra.mxu0 %v1076
    %1120 = vmatprep.subr.bf16.mxu0 0
    %1121 = vmatpush1.bf16.msra.mxu0 %v1077
    %1122 = vmatprep.subr.bf16.mxu0 0
    %1123 = vmatpush1.bf16.msra.mxu0 %v1078
    %1124 = vmatprep.subr.bf16.mxu0 0
    %1125 = vmatpush1.bf16.msra.mxu0 %v1079
    %1126 = vmatprep.subr.bf16.mxu0 0
    %1127 = vmatpush1.bf16.msra.mxu0 %v1080
    %1128 = vmatprep.subr.bf16.mxu0 0
    %1129 = vmatpush1.bf16.msra.mxu0 %v1081
    %1130 = vmatprep.mubr.bf16.mxu0 %v552
    %1131 = vmatmul.mubr.bf16.gmra.mrb[0].mxu0 %v551
    %v1132 = vpop.f32.mrb[0].mxu0
    %v1133 = vadd.f32 %v997, %v1132
    %v1134 = vpop.f32.mrb[0].mxu0
    %v1135 = vpop.f32.mrb[0].mxu0
    %v1136 = vpop.f32.mrb[0].mxu0
    %1137 = vdwg.mxu0
    %v1138 = vld [vmem:[#allocation17] sm:$0x1]
    %v1140 = vlaneseq
    %v1141 = vshrl.u32 %v1140, 7
    %v1142 = vsub.s32 0, %v1141
    %v1143 = vrot.slane %v1138, %v1142
    %v1145 = vadd.f32 %v1133, %v1143
    %vm1146 = vcmask 15360
    %1147 = vst.msk [vmem:[#allocation19] sm:$0xff] %vm1146, %v1145
    // Predicated region
    $region82: #{tpu_custom_call.1} parent=1 // pred_check
      _
    $region83: #{tpu_custom_call.1} parent=1 // pred_check_branch
      %1149 = sbr.rel (0) target = $region85
    $region84: #{tpu_custom_call.1} parent=1 // pred_region
      %s1151 = ssub.s32 128, 128
      %1152 = vsyncadd [#allocation4], %s1151
      %s1154 = sshll.u32 [#allocation19], 4
      %s1155 = int_to_ptr.vmem [resolvable:$true] %s1154
      %1157 = dma.vmem_to_hbm [thread:$0]  %s1155, 128, %s10, [#allocation4]
    $region85: #{tpu_custom_call.1} parent=1 // pred_fallthru
      _
    // Predicated region
    $region86: #{tpu_custom_call.1} parent=1 // pred_check
      _
    $region87: #{tpu_custom_call.1} parent=1 // pred_check_branch
      %1159 = sbr.rel (0) target = $region89
    $region88: #{tpu_custom_call.1} parent=1 // pred_region
      %1160 = dma.done [#allocation4], 128
    $region89: #{tpu_custom_call.1} parent=1 // pred_fallthru
      _
    %1161 = vsyncpa [#allocation3], 1
    %1162 = vsyncpa [#allocation6], 1
    %1163 = vsyncpa [#allocation9], 1
    %1164 = vsyncpa [#allocation12], 1
    %1165 = vsyncpa [#allocation15], 1
    %1166 = vsyncpa [#allocation18], 1
    %1167 = vsyncpa [#allocation4], 1

</llo_original>
